<compile_context>
chip_gen: v7x
topology: tpu7x:2x2x1
jax: 0.10.0
libtpu: 0.0.40
codegen_flags: <defaults>
</compile_context>

<pallas_src>
import functools

import jax
import jax.numpy as jnp
from jax.experimental import pallas as pl
from jax.experimental.pallas import tpu as pltpu


def _round_up(x, m):
    return ((x + m - 1) // m) * m


def _pick_batch_tile(B, tile_b):
    # Largest f32-sublane-aligned (multiple-of-8) tile <= tile_b.  For big
    # batches shrink it (never below 256 rows -- per-step overhead dominates
    # smaller tiles) so the grid exposes >= 8 steps (>= 4 per v7x TensorCore)
    # and the x / out DMAs pipeline behind compute.
    tb = min(tile_b, _round_up(B, 8))
    if B >= 8 * 256:
        tb = min(tb, max(256, _round_up(pl.cdiv(B, 8), 8)))
    return tb


def _sequential_mlp_kernel(x_ref, w1_ref, b1_ref, w2_ref, b2_ref, o_ref):
    # layer "0": Linear(F_in -> Hp)  -- bf16 MXU, f32 accumulate
    x_bf16 = x_ref[...].astype(jnp.bfloat16)
    h = jnp.dot(x_bf16, w1_ref[...], preferred_element_type=jnp.float32)
    # layer "1": bias + ReLU in f32  -- VPU filler under the MXU drain
    h = jnp.maximum(h + b1_ref[...], 0.0)
    # layer "2": Linear(Hp -> F_out) -- bf16 MXU, f32 accumulate
    y = jnp.dot(h.astype(jnp.bfloat16), w2_ref[...],
                preferred_element_type=jnp.float32)
    o_ref[...] = (y + b2_ref[...]).astype(o_ref.dtype)


def prepare_params(w1, b1, w2, b2):
    """One-time parameter prep (call OUTSIDE the per-step forward).

    * hidden width H padded to a multiple of 128 lanes (exact: padded hidden
      columns are ReLU(0 + 0) = 0 and multiply zero rows of w2),
    * weights cast to bf16 for the MXU,
    * biases kept f32 (VPU epilogue) and reshaped to (1, width).
    """
    H = w1.shape[1]
    Hp = _round_up(H, 128)
    w1p = jnp.pad(w1, ((0, 0), (0, Hp - H))).astype(jnp.bfloat16)
    b1p = jnp.pad(jnp.reshape(b1, (1, -1)), ((0, 0), (0, Hp - H))).astype(jnp.float32)
    w2p = jnp.pad(w2, ((0, Hp - H), (0, 0))).astype(jnp.bfloat16)
    b2p = jnp.reshape(b2, (1, -1)).astype(jnp.float32)
    return w1p, b1p, w2p, b2p


@functools.partial(jax.jit, static_argnames=("tile_b",))
def sequential_forward(x, w1p, b1p, w2p, b2p, *, tile_b=512):
    """Sequential(Linear, ReLU, Linear) forward in a single fused kernel.

    x  : [B, F_in]  float32
    w1p: [F_in, Hp] bf16   b1p: [1, Hp]    f32
    w2p: [Hp, F_out] bf16  b2p: [1, F_out] f32
    returns [B, F_out] float32
    """
    B, F_in = x.shape
    Hp = w1p.shape[1]
    F_out = w2p.shape[1]

    tb = _pick_batch_tile(B, tile_b)
    grid = (pl.cdiv(B, tb),)  # ragged last block: output writes are masked

    cost = pl.CostEstimate(
        flops=2 * B * (F_in * Hp + Hp * F_out),
        transcendentals=0,
        bytes_accessed=(4 * B * F_in            # x (f32)
                        + 2 * F_in * Hp          # w1 (bf16)
                        + 4 * Hp                 # b1 (f32)
                        + 2 * Hp * F_out         # w2 (bf16)
                        + 4 * F_out              # b2 (f32)
                        + 4 * B * F_out),        # out (f32)
    )

    return pl.pallas_call(
        _sequential_mlp_kernel,
        out_shape=jax.ShapeDtypeStruct((B, F_out), x.dtype),
        grid=grid,
        in_specs=[
            # x: streamed per batch tile (F_in kept at true width on purpose;
            # padding the K dim would 4x the x HBM traffic).
            pl.BlockSpec((tb, F_in), lambda i: (i, 0)),
            # weights / biases: constant index_map -> VMEM resident, DMA'd
            # once.  (Single-buffering them via pipeline_mode only matters
            # once layer widths approach v7x's 64 MiB VMEM; skipped here.)
            pl.BlockSpec((F_in, Hp), lambda i: (0, 0)),
            pl.BlockSpec((1, Hp), lambda i: (0, 0)),
            pl.BlockSpec((Hp, F_out), lambda i: (0, 0)),
            pl.BlockSpec((1, F_out), lambda i: (0, 0)),
        ],
        # output at true F_out width (block last dim == full array dim):
        # avoids 8x padded writeback + a post-kernel slice copy for tiny F_out.
        out_specs=pl.BlockSpec((tb, F_out), lambda i: (i, 0)),
        compiler_params=pltpu.CompilerParams(
            # batch axis is independent -> shard across v7x's 2 TCs
            dimension_semantics=("parallel",),
            # tiny per-step footprint; safe on every generation
            vmem_limit_bytes=32 << 20,
        ),
        cost_estimate=cost,
    )(x, w1p, b1p, w2p, b2p)


def init_params(key, f_in, hidden, f_out):
    """Deterministic init mimicking torch.nn.Linear (uniform +-1/sqrt(fan_in))."""
    k1, k2, k3, k4 = jax.random.split(key, 4)
    lim1 = 1.0 / jnp.sqrt(jnp.float32(f_in))
    lim2 = 1.0 / jnp.sqrt(jnp.float32(hidden))
    w1 = jax.random.uniform(k1, (f_in, hidden), jnp.float32, -lim1, lim1)
    b1 = jax.random.uniform(k2, (1, hidden), jnp.float32, -lim1, lim1)
    w2 = jax.random.uniform(k3, (hidden, f_out), jnp.float32, -lim2, lim2)
    b2 = jax.random.uniform(k4, (1, f_out), jnp.float32, -lim2, lim2)
    return w1, b1, w2, b2


def reference_forward_f32(x, w1, b1, w2, b2):
    h = jnp.maximum(x @ w1 + b1, 0.0)
    return h @ w2 + b2


def reference_forward_bf16(x, w1, b1, w2, b2):
    # matches the kernel's bf16-MXU / f32-accumulate numerics
    h = jnp.dot(x.astype(jnp.bfloat16), w1.astype(jnp.bfloat16),
                preferred_element_type=jnp.float32)
    h = jnp.maximum(h + b1, 0.0)
    y = jnp.dot(h.astype(jnp.bfloat16), w2.astype(jnp.bfloat16),
                preferred_element_type=jnp.float32)
    return y + b2


if __name__ == "__main__":
    key = jax.random.PRNGKey(0)
    kx, kp = jax.random.split(key)

    # Sequential(Linear(32->64), ReLU, Linear(64->16)); batch sized to give
    # two pipelined grid steps at the default 512-row tile.
    B, F_IN, HID, F_OUT = 1024, 32, 64, 16
    x = jax.random.normal(kx, (B, F_IN), jnp.float32)
    w1, b1, w2, b2 = init_params(kp, F_IN, HID, F_OUT)

    # one-time parameter prep (padding + bf16 cast) outside the forward
    w1p, b1p, w2p, b2p = prepare_params(w1, b1, w2, b2)

    y = sequential_forward(x, w1p, b1p, w2p, b2p)
    y = jax.block_until_ready(y)
    assert y.shape == (B, F_OUT)

    y_ref_bf16 = reference_forward_bf16(x, w1, b1, w2, b2)
    y_ref_f32 = reference_forward_f32(x, w1, b1, w2, b2)
    assert jnp.allclose(y, y_ref_bf16, atol=2e-3, rtol=2e-3)
    assert jnp.allclose(y, y_ref_f32, atol=5e-2, rtol=5e-2)

    # ragged batch paths (no wrapper-side padding): tiny batch and a batch
    # that is not a multiple of the tile.
    y_small = jax.block_until_ready(sequential_forward(x[:7], w1p, b1p, w2p, b2p))
    assert y_small.shape == (7, F_OUT)
    assert jnp.allclose(y_small, y_ref_bf16[:7], atol=2e-3, rtol=2e-3)

    y_ragged = jax.block_until_ready(sequential_forward(x[:300], w1p, b1p, w2p, b2p))
    assert y_ragged.shape == (300, F_OUT)
    assert jnp.allclose(y_ragged, y_ref_bf16[:300], atol=2e-3, rtol=2e-3)

    print("KERNEL_OK")
</pallas_src>

<mosaic_0001>
module attributes {stable_mosaic.version = 11 : i64} {
  func.func @_sequential_mlp_kernel(%arg0: i32, %arg1: memref<512x32xf32, #tpu.memory_space<vmem>>, %arg2: memref<32x128xbf16, #tpu.memory_space<vmem>>, %arg3: memref<1x128xf32, #tpu.memory_space<vmem>>, %arg4: memref<128x16xbf16, #tpu.memory_space<vmem>>, %arg5: memref<1x16xf32, #tpu.memory_space<vmem>>, %arg6: memref<512x16xf32, #tpu.memory_space<vmem>>) attributes {dimension_semantics = [#tpu.dimension_semantics<parallel>], iteration_bounds = array<i64: 2>, scalar_prefetch = 0 : i64, scratch_operands = 0 : i64, tpu.core_type = #tpu.core_type<tc>, window_params = [{transform_indices = @transform_0, window_bounds = array<i64: 512, 32>}, {pipeline_mode = #tpu.pipeline_mode<synchronous>, transform_indices = @transform_1, window_bounds = array<i64: 32, 128>}, {pipeline_mode = #tpu.pipeline_mode<synchronous>, transform_indices = @transform_2, window_bounds = array<i64: 1, 128>}, {pipeline_mode = #tpu.pipeline_mode<synchronous>, transform_indices = @transform_3, window_bounds = array<i64: 128, 16>}, {pipeline_mode = #tpu.pipeline_mode<synchronous>, transform_indices = @transform_4, window_bounds = array<i64: 1, 16>}, {transform_indices = @transform_5, window_bounds = array<i64: 512, 16>}]} {
    %c0 = arith.constant 0 : index
    %c0_0 = arith.constant 0 : index
    %0 = vector.load %arg1[%c0, %c0_0] : memref<512x32xf32, #tpu.memory_space<vmem>>, vector<512x32xf32>
    %1 = arith.truncf %0 : vector<512x32xf32> to vector<512x32xbf16>
    %c0_1 = arith.constant 0 : index
    %c0_2 = arith.constant 0 : index
    %2 = vector.load %arg2[%c0_1, %c0_2] : memref<32x128xbf16, #tpu.memory_space<vmem>>, vector<32x128xbf16>
    %cst = arith.constant dense<0.000000e+00> : vector<512x128xf32>
    %3 = tpu.matmul %1, %2, %cst {dimension_numbers = #tpu.dot_dimension_numbers<[1], [0], [0], [1], [0, 0, 1, 1], [], []>} : vector<512x32xbf16>, vector<32x128xbf16>, vector<512x128xf32> -> vector<512x128xf32>
    %c0_3 = arith.constant 0 : index
    %c0_4 = arith.constant 0 : index
    %4 = vector.load %arg3[%c0_3, %c0_4] : memref<1x128xf32, #tpu.memory_space<vmem>>, vector<1x128xf32>
    %5 = vector.broadcast %4 : vector<1x128xf32> to vector<512x128xf32>
    %6 = arith.addf %3, %5 : vector<512x128xf32>
    %cst_5 = arith.constant 0.000000e+00 : f32
    %7 = vector.broadcast %cst_5 : f32 to vector<512x128xf32>
    %8 = arith.maximumf %6, %7 : vector<512x128xf32>
    %9 = arith.truncf %8 : vector<512x128xf32> to vector<512x128xbf16>
    %c0_6 = arith.constant 0 : index
    %c0_7 = arith.constant 0 : index
    %10 = vector.load %arg4[%c0_6, %c0_7] : memref<128x16xbf16, #tpu.memory_space<vmem>>, vector<128x16xbf16>
    %cst_8 = arith.constant dense<0.000000e+00> : vector<512x16xf32>
    %11 = tpu.matmul %9, %10, %cst_8 {dimension_numbers = #tpu.dot_dimension_numbers<[1], [0], [0], [1], [0, 0, 1, 1], [], []>} : vector<512x128xbf16>, vector<128x16xbf16>, vector<512x16xf32> -> vector<512x16xf32>
    %c0_9 = arith.constant 0 : index
    %c0_10 = arith.constant 0 : index
    %12 = vector.load %arg5[%c0_9, %c0_10] : memref<1x16xf32, #tpu.memory_space<vmem>>, vector<1x16xf32>
    %13 = vector.broadcast %12 : vector<1x16xf32> to vector<512x16xf32>
    %14 = arith.addf %11, %13 : vector<512x16xf32>
    %c0_11 = arith.constant 0 : index
    %c0_12 = arith.constant 0 : index
    %15 = vector.load %arg6[%c0_11, %c0_12] : memref<512x16xf32, #tpu.memory_space<vmem>>, vector<512x16xf32>
    tpu.vector_store %arg6[%c0_11, %c0_12], %14 {strides = array<i32>} : memref<512x16xf32, #tpu.memory_space<vmem>>, vector<512x16xf32>,
    return
  }
  func.func @transform_0(%arg0: i32) -> (i32, i32) {
    %c0_i32 = arith.constant 0 : i32
    %c0_i32_0 = arith.constant 0 : i32
    return %arg0, %c0_i32 : i32, i32
  }
  func.func @transform_1(%arg0: i32) -> (i32, i32) {
    %c0_i32 = arith.constant 0 : i32
    %c0_i32_0 = arith.constant 0 : i32
    %c0_i32_1 = arith.constant 0 : i32
    return %c0_i32, %c0_i32_0 : i32, i32
  }
  func.func @transform_2(%arg0: i32) -> (i32, i32) {
    %c0_i32 = arith.constant 0 : i32
    %c0_i32_0 = arith.constant 0 : i32
    %c0_i32_1 = arith.constant 0 : i32
    return %c0_i32, %c0_i32_0 : i32, i32
  }
  func.func @transform_3(%arg0: i32) -> (i32, i32) {
    %c0_i32 = arith.constant 0 : i32
    %c0_i32_0 = arith.constant 0 : i32
    %c0_i32_1 = arith.constant 0 : i32
    return %c0_i32, %c0_i32_0 : i32, i32
  }
  func.func @transform_4(%arg0: i32) -> (i32, i32) {
    %c0_i32 = arith.constant 0 : i32
    %c0_i32_0 = arith.constant 0 : i32
    %c0_i32_1 = arith.constant 0 : i32
    return %c0_i32, %c0_i32_0 : i32, i32
  }
  func.func @transform_5(%arg0: i32) -> (i32, i32) {
    %c0_i32 = arith.constant 0 : i32
    %c0_i32_0 = arith.constant 0 : i32
    return %arg0, %c0_i32 : i32, i32
  }
}

</mosaic_0001>

<llo_original>
// kernel: sequential_forward.1
$region0: #{sequential_forward.1}
  #allocation0 [shape = 'u32[]', space=smem, size = 0x4, offset = 0x4, fixed_abs, tag = 'smem constant byte address 0x4 - core index']
  #allocation1 [shape = 'u32[144,128]{1,0:T(1,128)}', space=vmem, size = 0x12000, scoped, tag = 'internal scratch']
  %s0 = inlined_call_operand.vmem [shape: f32[1024,32], index: 0, kind: input, shape index: {}]
  %s1 = inlined_call_operand.vmem [shape: bf16[32,128], index: 1, kind: input, shape index: {}]
  %s2 = inlined_call_operand.vmem [shape: f32[1,128], index: 2, kind: input, shape index: {}]
  %s3 = inlined_call_operand.vmem [shape: bf16[128,16], index: 3, kind: input, shape index: {}]
  %s4 = inlined_call_operand.vmem [shape: f32[1,16], index: 4, kind: input, shape index: {}]
  %s5 = inlined_call_operand.vmem [shape: f32[1024,16], index: 5, kind: output, shape index: {}]
  %s6 = sld [smem:[#allocation0]]
  $region53: #{sequential_forward.1} parent=0
    _
  %s8 = ssub.s32 1, %s6
  %s9 = scalar_select 0, %s8, %s6
  loop: start=0, step=1, limit=4
  $region2: #{sequential_forward.1} parent=0 // loop_pre_header
    _
  $region3: #{sequential_forward.1} parent=0 // loop_header
    %s11 = sphi 0, %s15
    %p12 = scmp.ge.s32.totalorder %s11, 4
    %s21 = sphi 0, %s23
    %s24 = sphi 0, %s21
    %s25 = sphi 0, %s24
    %s41 = sphi 0, %s25
    %s45 = sphi 0, %s45
    %s47 = sphi 0, %s45
    %s48 = sphi 0, %s47
    %s62 = sphi 0, %s48
    %s66 = sphi 0, %s66
    %s68 = sphi 0, %s66
    %s69 = sphi 0, %s68
    %s83 = sphi 0, %s69
    %s87 = sphi 0, %s87
    %s89 = sphi 0, %s87
    %s90 = sphi 0, %s89
    %s104 = sphi 0, %s90
    %s108 = sphi 0, %s108
    %s110 = sphi 0, %s108
    %s111 = sphi 0, %s110
    %s125 = sphi 0, %s111
    %s131 = sphi 0, %s133
    %s134 = sphi 0, %s131
    %s135 = sphi 0, %s134
    %s151 = sphi 0, %s135
  $region4: #{sequential_forward.1} parent=0 // loop_header_branch
    %14 = sbr.rel (%p12) target = $region8
  $region5: #{sequential_forward.1} parent=0 // loop_body
    %s16 = ssub.s32 %s11, 1
    %s17 = ssub.s32 %s11, 2
    %s18 = sadd.s32 %s11, 1
    %s19 = ssub.s32 %s11, %s18
    %p20 = scmp.eq.s32.totalorder %s19, 0
    %s22 = sadd.s32 %s21, 1
    %s23 = scalar_select %p20, %s21, %s22
    %p26 = pneg %p20
    %p27 = scmp.eq.s32.totalorder %s11, 1
    %p28 = por %p26, %p27
    %p29 = scmp.ne.s32.totalorder %s21, %s24
    %p30 = scmp.eq.s32.totalorder %s11, 0
    %p31 = por %p29, %p30
    %p32 = scmp.ne.s32.totalorder %s21, %s24
    %p33 = scmp.eq.s32.totalorder %s16, 1
    %p34 = por %p32, %p33
    %p35 = scmp.ne.s32.totalorder %s24, %s25
    %p36 = scmp.eq.s32.totalorder %s16, 0
    %p37 = por %p35, %p36
    %p38 = scmp.ne.s32.totalorder %s24, %s25
    %p39 = scmp.eq.s32.totalorder %s17, 1
    %p40 = por %p38, %p39
    %p42 = scmp.ne.s32.totalorder %s25, %s41
    %p43 = scmp.eq.s32.totalorder %s17, 0
    %p44 = por %p42, %p43
    %s46 = sadd.s32 %s45, 1
    %p49 = scmp.eq.s32.totalorder %s11, 1
    %p50 = scmp.ne.s32.totalorder %s45, %s47
    %p51 = scmp.eq.s32.totalorder %s11, 0
    %p52 = por %p50, %p51
    %p53 = scmp.ne.s32.totalorder %s45, %s47
    %p54 = scmp.eq.s32.totalorder %s16, 1
    %p55 = por %p53, %p54
    %p56 = scmp.ne.s32.totalorder %s47, %s48
    %p57 = scmp.eq.s32.totalorder %s16, 0
    %p58 = por %p56, %p57
    %p59 = scmp.ne.s32.totalorder %s47, %s48
    %p60 = scmp.eq.s32.totalorder %s17, 1
    %p61 = por %p59, %p60
    %p63 = scmp.ne.s32.totalorder %s48, %s62
    %p64 = scmp.eq.s32.totalorder %s17, 0
    %p65 = por %p63, %p64
    %s67 = sadd.s32 %s66, 1
    %p70 = scmp.eq.s32.totalorder %s11, 1
    %p71 = scmp.ne.s32.totalorder %s66, %s68
    %p72 = scmp.eq.s32.totalorder %s11, 0
    %p73 = por %p71, %p72
    %p74 = scmp.ne.s32.totalorder %s66, %s68
    %p75 = scmp.eq.s32.totalorder %s16, 1
    %p76 = por %p74, %p75
    %p77 = scmp.ne.s32.totalorder %s68, %s69
    %p78 = scmp.eq.s32.totalorder %s16, 0
    %p79 = por %p77, %p78
    %p80 = scmp.ne.s32.totalorder %s68, %s69
    %p81 = scmp.eq.s32.totalorder %s17, 1
    %p82 = por %p80, %p81
    %p84 = scmp.ne.s32.totalorder %s69, %s83
    %p85 = scmp.eq.s32.totalorder %s17, 0
    %p86 = por %p84, %p85
    %s88 = sadd.s32 %s87, 1
    %p91 = scmp.eq.s32.totalorder %s11, 1
    %p92 = scmp.ne.s32.totalorder %s87, %s89
    %p93 = scmp.eq.s32.totalorder %s11, 0
    %p94 = por %p92, %p93
    %p95 = scmp.ne.s32.totalorder %s87, %s89
    %p96 = scmp.eq.s32.totalorder %s16, 1
    %p97 = por %p95, %p96
    %p98 = scmp.ne.s32.totalorder %s89, %s90
    %p99 = scmp.eq.s32.totalorder %s16, 0
    %p100 = por %p98, %p99
    %p101 = scmp.ne.s32.totalorder %s89, %s90
    %p102 = scmp.eq.s32.totalorder %s17, 1
    %p103 = por %p101, %p102
    %p105 = scmp.ne.s32.totalorder %s90, %s104
    %p106 = scmp.eq.s32.totalorder %s17, 0
    %p107 = por %p105, %p106
    %s109 = sadd.s32 %s108, 1
    %p112 = scmp.eq.s32.totalorder %s11, 1
    %p113 = scmp.ne.s32.totalorder %s108, %s110
    %p114 = scmp.eq.s32.totalorder %s11, 0
    %p115 = por %p113, %p114
    %p116 = scmp.ne.s32.totalorder %s108, %s110
    %p117 = scmp.eq.s32.totalorder %s16, 1
    %p118 = por %p116, %p117
    %p119 = scmp.ne.s32.totalorder %s110, %s111
    %p120 = scmp.eq.s32.totalorder %s16, 0
    %p121 = por %p119, %p120
    %p122 = scmp.ne.s32.totalorder %s110, %s111
    %p123 = scmp.eq.s32.totalorder %s17, 1
    %p124 = por %p122, %p123
    %p126 = scmp.ne.s32.totalorder %s111, %s125
    %p127 = scmp.eq.s32.totalorder %s17, 0
    %p128 = por %p126, %p127
    %s129 = ssub.s32 %s11, %s18
    %p130 = scmp.eq.s32.totalorder %s129, 0
    %s132 = sadd.s32 %s131, 1
    %s133 = scalar_select %p130, %s131, %s132
    %p136 = pneg %p130
    %p137 = scmp.eq.s32.totalorder %s11, 1
    %p138 = por %p136, %p137
    %p139 = scmp.ne.s32.totalorder %s131, %s134
    %p140 = scmp.eq.s32.totalorder %s11, 0
    %p141 = por %p139, %p140
    %p142 = scmp.ne.s32.totalorder %s131, %s134
    %p143 = scmp.eq.s32.totalorder %s16, 1
    %p144 = por %p142, %p143
    %p145 = scmp.ne.s32.totalorder %s134, %s135
    %p146 = scmp.eq.s32.totalorder %s16, 0
    %p147 = por %p145, %p146
    %p148 = scmp.ne.s32.totalorder %s134, %s135
    %p149 = scmp.eq.s32.totalorder %s17, 1
    %p150 = por %p148, %p149
    %p152 = scmp.ne.s32.totalorder %s135, %s151
    %p153 = scmp.eq.s32.totalorder %s17, 0
    %p154 = por %p152, %p153
    %p155 = scmp.le.s32.totalorder 1, %s11
    %p156 = scmp.lt.s32.totalorder %s11, 3
    %p157 = pnand %p155, %p156
    %p158 = pneg %p157
    // Predicated region
    $region9: #{sequential_forward.1} parent=5 // pred_check
      _
    $region10: #{sequential_forward.1} parent=5 // pred_check_branch
      %160 = sbr.rel (%p157) target = $region12
    $region11: #{sequential_forward.1} parent=5 // pred_region
      %s161 = ssub.s32 %s11, 1
      // Predicated region
      $region13: #{sequential_forward.1} parent=11 // pred_check
        %p162 = pneg %p58
      $region14: #{sequential_forward.1} parent=11 // pred_check_branch
        %164 = sbr.rel (%p162) target = $region16
      $region15: #{sequential_forward.1} parent=11 // pred_region
        _
      $region16: #{sequential_forward.1} parent=11 // pred_fallthru
        _
      // Predicated region
      $region17: #{sequential_forward.1} parent=11 // pred_check
        %p165 = pneg %p79
      $region18: #{sequential_forward.1} parent=11 // pred_check_branch
        %167 = sbr.rel (%p165) target = $region20
      $region19: #{sequential_forward.1} parent=11 // pred_region
        _
      $region20: #{sequential_forward.1} parent=11 // pred_fallthru
        _
      // Predicated region
      $region21: #{sequential_forward.1} parent=11 // pred_check
        %p168 = pneg %p100
      $region22: #{sequential_forward.1} parent=11 // pred_check_branch
        %170 = sbr.rel (%p168) target = $region24
      $region23: #{sequential_forward.1} parent=11 // pred_region
        _
      $region24: #{sequential_forward.1} parent=11 // pred_fallthru
        _
      // Predicated region
      $region25: #{sequential_forward.1} parent=11 // pred_check
        %p171 = pneg %p121
      $region26: #{sequential_forward.1} parent=11 // pred_check_branch
        %173 = sbr.rel (%p171) target = $region28
      $region27: #{sequential_forward.1} parent=11 // pred_region
        _
      $region28: #{sequential_forward.1} parent=11 // pred_fallthru
        _
    $region12: #{sequential_forward.1} parent=5 // pred_fallthru
      _
    %p174 = scmp.lt.s32.totalorder %s11, 2
    // Predicated region
    $region29: #{sequential_forward.1} parent=5 // pred_check
      %p175 = pneg %p174
    $region30: #{sequential_forward.1} parent=5 // pred_check_branch
      %177 = sbr.rel (%p175) target = $region32
    $region31: #{sequential_forward.1} parent=5 // pred_region
      // Predicated region
      $region33: #{sequential_forward.1} parent=31 // pred_check
        %p178 = pneg %p31
      $region34: #{sequential_forward.1} parent=31 // pred_check_branch
        %180 = sbr.rel (%p178) target = $region36
      $region35: #{sequential_forward.1} parent=31 // pred_region
        %s181 = smul.u32 64, %s11
        %p182 = scmp.lt.s32.totalorder %s181, 127
        %s183 = scalar_select %p182, %s181, 127
        %s184 = smul.addr %s183, 8
        %s185 = scalar_lea.vmem %s0, %s184
        %s186 = smul.u32 64, %s11
      $region36: #{sequential_forward.1} parent=31 // pred_fallthru
        _
    $region32: #{sequential_forward.1} parent=5 // pred_fallthru
      _
    %p187 = scmp.le.s32.totalorder 1, %s11
    %p188 = scmp.lt.s32.totalorder %s11, 3
    %p189 = pnand %p187, %p188
    %p190 = pneg %p189
    // Predicated region
    $region37: #{sequential_forward.1} parent=5 // pred_check
      _
    $region38: #{sequential_forward.1} parent=5 // pred_check_branch
      %192 = sbr.rel (%p189) target = $region40
    $region39: #{sequential_forward.1} parent=5 // pred_region
      %s193 = ssub.s32 %s11, 1
      %s194 = smul.u32 64, %s16
      %p195 = scmp.lt.s32.totalorder %s194, 127
      %s196 = scalar_select %p195, %s194, 127
      %s197 = smul.addr %s196, 8
      %s198 = scalar_lea.vmem %s0, %s197
      %p199 = pneg %p37
      %p200 = pneg %p34
      %p201 = pneg %p58
      %p202 = pneg %p55
      %p203 = pneg %p79
      %p204 = pneg %p76
      %p205 = pneg %p100
      %p206 = pneg %p97
      %p207 = pneg %p121
      %p208 = pneg %p118
      %p209 = pneg %p147
      %p210 = pneg %p144
      %s211 = smul.u32 64, %s16
      %p212 = scmp.lt.s32.totalorder %s211, 127
      %s213 = scalar_select %p212, %s211, 127
      %s214 = smul.addr %s213, 8
      %s215 = scalar_lea.vmem %s5, %s214
      %s216 = smul.u32 64, %s16
      %p217 = scmp.lt.s32.totalorder %s216, 127
      %s218 = scalar_select %p217, %s216, 127
      %s219 = smul.addr %s218, 8
      %s220 = scalar_lea.vmem %s0, %s219
      %s221 = smul.u32 64, %s16
      %s222 = smul.u32 64, %s16
      %p223 = scmp.lt.s32.totalorder %s222, 127
      %s224 = scalar_select %p223, %s222, 127
      %s225 = smul.addr %s224, 8
      %s226 = scalar_lea.vmem %s5, %s225
      %s227 = smul.u32 64, %s16
      %v229 = vld [vmem:[%s220] sm:$0xff]
      %v230 = vld [vmem:[%s220 + $0x8] sm:$0xff]
      %v231 = vld [vmem:[%s220 + $0x10] sm:$0xff]
      %v232 = vld [vmem:[%s220 + $0x18] sm:$0xff]
      %v233 = vld [vmem:[%s220 + $0x20] sm:$0xff]
      %v234 = vld [vmem:[%s220 + $0x28] sm:$0xff]
      %v235 = vld [vmem:[%s220 + $0x30] sm:$0xff]
      %v236 = vld [vmem:[%s220 + $0x38] sm:$0xff]
      %v237 = vld [vmem:[%s220 + $0x40] sm:$0xff]
      %v238 = vld [vmem:[%s220 + $0x48] sm:$0xff]
      %v239 = vld [vmem:[%s220 + $0x50] sm:$0xff]
      %v240 = vld [vmem:[%s220 + $0x58] sm:$0xff]
      %v241 = vld [vmem:[%s220 + $0x60] sm:$0xff]
      %v242 = vld [vmem:[%s220 + $0x68] sm:$0xff]
      %v243 = vld [vmem:[%s220 + $0x70] sm:$0xff]
      %v244 = vld [vmem:[%s220 + $0x78] sm:$0xff]
      %v245 = vld [vmem:[%s220 + $0x80] sm:$0xff]
      %v246 = vld [vmem:[%s220 + $0x88] sm:$0xff]
      %v247 = vld [vmem:[%s220 + $0x90] sm:$0xff]
      %v248 = vld [vmem:[%s220 + $0x98] sm:$0xff]
      %v249 = vld [vmem:[%s220 + $0xa0] sm:$0xff]
      %v250 = vld [vmem:[%s220 + $0xa8] sm:$0xff]
      %v251 = vld [vmem:[%s220 + $0xb0] sm:$0xff]
      %v252 = vld [vmem:[%s220 + $0xb8] sm:$0xff]
      %v253 = vld [vmem:[%s220 + $0xc0] sm:$0xff]
      %v254 = vld [vmem:[%s220 + $0xc8] sm:$0xff]
      %v255 = vld [vmem:[%s220 + $0xd0] sm:$0xff]
      %v256 = vld [vmem:[%s220 + $0xd8] sm:$0xff]
      %v257 = vld [vmem:[%s220 + $0xe0] sm:$0xff]
      %v258 = vld [vmem:[%s220 + $0xe8] sm:$0xff]
      %v259 = vld [vmem:[%s220 + $0xf0] sm:$0xff]
      %v260 = vld [vmem:[%s220 + $0xf8] sm:$0xff]
      %v261 = vld [vmem:[%s220 + $0x100] sm:$0xff]
      %v262 = vld [vmem:[%s220 + $0x108] sm:$0xff]
      %v263 = vld [vmem:[%s220 + $0x110] sm:$0xff]
      %v264 = vld [vmem:[%s220 + $0x118] sm:$0xff]
      %v265 = vld [vmem:[%s220 + $0x120] sm:$0xff]
      %v266 = vld [vmem:[%s220 + $0x128] sm:$0xff]
      %v267 = vld [vmem:[%s220 + $0x130] sm:$0xff]
      %v268 = vld [vmem:[%s220 + $0x138] sm:$0xff]
      %v269 = vld [vmem:[%s220 + $0x140] sm:$0xff]
      %v270 = vld [vmem:[%s220 + $0x148] sm:$0xff]
      %v271 = vld [vmem:[%s220 + $0x150] sm:$0xff]
      %v272 = vld [vmem:[%s220 + $0x158] sm:$0xff]
      %v273 = vld [vmem:[%s220 + $0x160] sm:$0xff]
      %v274 = vld [vmem:[%s220 + $0x168] sm:$0xff]
      %v275 = vld [vmem:[%s220 + $0x170] sm:$0xff]
      %v276 = vld [vmem:[%s220 + $0x178] sm:$0xff]
      %v277 = vld [vmem:[%s220 + $0x180] sm:$0xff]
      %v278 = vld [vmem:[%s220 + $0x188] sm:$0xff]
      %v279 = vld [vmem:[%s220 + $0x190] sm:$0xff]
      %v280 = vld [vmem:[%s220 + $0x198] sm:$0xff]
      %v281 = vld [vmem:[%s220 + $0x1a0] sm:$0xff]
      %v282 = vld [vmem:[%s220 + $0x1a8] sm:$0xff]
      %v283 = vld [vmem:[%s220 + $0x1b0] sm:$0xff]
      %v284 = vld [vmem:[%s220 + $0x1b8] sm:$0xff]
      %v285 = vld [vmem:[%s220 + $0x1c0] sm:$0xff]
      %v286 = vld [vmem:[%s220 + $0x1c8] sm:$0xff]
      %v287 = vld [vmem:[%s220 + $0x1d0] sm:$0xff]
      %v288 = vld [vmem:[%s220 + $0x1d8] sm:$0xff]
      %v289 = vld [vmem:[%s220 + $0x1e0] sm:$0xff]
      %v290 = vld [vmem:[%s220 + $0x1e8] sm:$0xff]
      %v291 = vld [vmem:[%s220 + $0x1f0] sm:$0xff]
      %v292 = vld [vmem:[%s220 + $0x1f8] sm:$0xff]
      %v293 = vpack.c.bf16 %v230, %v229
      %v294 = vpack.c.bf16 %v232, %v231
      %v295 = vpack.c.bf16 %v234, %v233
      %v296 = vpack.c.bf16 %v236, %v235
      %v297 = vpack.c.bf16 %v238, %v237
      %v298 = vpack.c.bf16 %v240, %v239
      %v299 = vpack.c.bf16 %v242, %v241
      %v300 = vpack.c.bf16 %v244, %v243
      %v301 = vpack.c.bf16 %v246, %v245
      %v302 = vpack.c.bf16 %v248, %v247
      %v303 = vpack.c.bf16 %v250, %v249
      %v304 = vpack.c.bf16 %v252, %v251
      %v305 = vpack.c.bf16 %v254, %v253
      %v306 = vpack.c.bf16 %v256, %v255
      %v307 = vpack.c.bf16 %v258, %v257
      %v308 = vpack.c.bf16 %v260, %v259
      %v309 = vpack.c.bf16 %v262, %v261
      %v310 = vpack.c.bf16 %v264, %v263
      %v311 = vpack.c.bf16 %v266, %v265
      %v312 = vpack.c.bf16 %v268, %v267
      %v313 = vpack.c.bf16 %v270, %v269
      %v314 = vpack.c.bf16 %v272, %v271
      %v315 = vpack.c.bf16 %v274, %v273
      %v316 = vpack.c.bf16 %v276, %v275
      %v317 = vpack.c.bf16 %v278, %v277
      %v318 = vpack.c.bf16 %v280, %v279
      %v319 = vpack.c.bf16 %v282, %v281
      %v320 = vpack.c.bf16 %v284, %v283
      %v321 = vpack.c.bf16 %v286, %v285
      %v322 = vpack.c.bf16 %v288, %v287
      %v323 = vpack.c.bf16 %v290, %v289
      %v324 = vpack.c.bf16 %v292, %v291
      %v325 = vld [vmem:[%s1] sm:$0xf]
      %v326 = vld [vmem:[%s1 + $0x4] sm:$0xf]
      %v327 = vld [vmem:[%s1 + $0x8] sm:$0xf]
      %v328 = vld [vmem:[%s1 + $0xc] sm:$0xf]
      %v329 = vld [vmem:[%s2] sm:$0x1]
      %v331 = vlaneseq
      %v332 = vshrl.u32 %v331, 7
      %v333 = vsub.s32 0, %v332
      %v334 = vrot.slane %v329, %v333
      %v340 = vunpack.c.l.b16 %v325
      %v341 = vunpack.c.l.b16 %v326
      %v342 = vunpack.c.l.b16 %v327
      %v343 = vunpack.c.l.b16 %v328
      %v344 = vpack.c.b16 %v341, %v340
      %v345 = vpack.c.b16 %v343, %v342
      %vm348 = vcmask 261120
      %v350 = vsel %vm348, %v293, 0
      %v353 = vsel %vm348, %v294, 0
      %v356 = vsel %vm348, %v295, 0
      %v359 = vsel %vm348, %v296, 0
      %v362 = vsel %vm348, %v297, 0
      %v365 = vsel %vm348, %v298, 0
      %v368 = vsel %vm348, %v299, 0
      %v371 = vsel %vm348, %v300, 0
      %v374 = vsel %vm348, %v301, 0
      %v377 = vsel %vm348, %v302, 0
      %v380 = vsel %vm348, %v303, 0
      %v383 = vsel %vm348, %v304, 0
      %v386 = vsel %vm348, %v305, 0
      %v389 = vsel %vm348, %v306, 0
      %v392 = vsel %vm348, %v307, 0
      %v395 = vsel %vm348, %v308, 0
      %v398 = vsel %vm348, %v309, 0
      %v401 = vsel %vm348, %v310, 0
      %v404 = vsel %vm348, %v311, 0
      %v407 = vsel %vm348, %v312, 0
      %v410 = vsel %vm348, %v313, 0
      %v413 = vsel %vm348, %v314, 0
      %v416 = vsel %vm348, %v315, 0
      %v419 = vsel %vm348, %v316, 0
      %v422 = vsel %vm348, %v317, 0
      %v425 = vsel %vm348, %v318, 0
      %v428 = vsel %vm348, %v319, 0
      %v431 = vsel %vm348, %v320, 0
      %v434 = vsel %vm348, %v321, 0
      %v437 = vsel %vm348, %v322, 0
      %v440 = vsel %vm348, %v323, 0
      %v443 = vsel %vm348, %v324, 0
      %445 = vmatprep.subr.bf16.mxu0 0
      %446 = vmatpush1.bf16.msra.mxu0 %v344
      %447 = vmatprep.subr.bf16.mxu0 0
      %448 = vmatpush1.bf16.msra.mxu0 %v345
      %449 = vmatprep.subr.bf16.mxu0 0
      %450 = vmatpush1.bf16.msra.mxu0 0
      %451 = vmatprep.subr.bf16.mxu0 0
      %452 = vmatpush1.bf16.msra.mxu0 0
      %453 = vmatprep.subr.bf16.mxu0 0
      %454 = vmatpush1.bf16.msra.mxu0 0
      %455 = vmatprep.subr.bf16.mxu0 0
      %456 = vmatpush1.bf16.msra.mxu0 0
      %457 = vmatprep.subr.bf16.mxu0 0
      %458 = vmatpush1.bf16.msra.mxu0 0
      %459 = vmatprep.subr.bf16.mxu0 0
      %460 = vmatpush1.bf16.msra.mxu0 0
      %461 = vmatprep.subr.bf16.mxu0 0
      %462 = vmatpush1.bf16.msra.mxu0 0
      %463 = vmatprep.subr.bf16.mxu0 0
      %464 = vmatpush1.bf16.msra.mxu0 0
      %465 = vmatprep.subr.bf16.mxu0 0
      %466 = vmatpush1.bf16.msra.mxu0 0
      %467 = vmatprep.subr.bf16.mxu0 0
      %468 = vmatpush1.bf16.msra.mxu0 0
      %469 = vmatprep.subr.bf16.mxu0 0
      %470 = vmatpush1.bf16.msra.mxu0 0
      %471 = vmatprep.subr.bf16.mxu0 0
      %472 = vmatpush1.bf16.msra.mxu0 0
      %473 = vmatprep.subr.bf16.mxu0 0
      %474 = vmatpush1.bf16.msra.mxu0 0
      %475 = vmatprep.subr.bf16.mxu0 0
      %476 = vmatpush1.bf16.msra.mxu0 0
      %477 = vmatprep.mubr.bf16.mxu0 0
      %478 = vmatmul.mubr.bf16.gmra.mrb[0].mxu0 %v350
      %v479 = vpop.f32.mrb[0].mxu0
      %v480 = vadd.f32 %v334, %v479
      %v481 = vpop.f32.mrb[0].mxu0
      %v482 = vpop.f32.mrb[0].mxu0
      %v483 = vadd.f32 %v334, %v482
      %v484 = vpop.f32.mrb[0].mxu0
      %485 = vmatprep.mubr.bf16.mxu0 0
      %486 = vmatmul.mubr.bf16.gmra.mrb[0].mxu0 %v353
      %v487 = vpop.f32.mrb[0].mxu0
      %v488 = vadd.f32 %v334, %v487
      %v489 = vpop.f32.mrb[0].mxu0
      %v490 = vpop.f32.mrb[0].mxu0
      %v491 = vadd.f32 %v334, %v490
      %v492 = vpop.f32.mrb[0].mxu0
      %493 = vmatprep.mubr.bf16.mxu0 0
      %494 = vmatmul.mubr.bf16.gmra.mrb[0].mxu0 %v356
      %v495 = vpop.f32.mrb[0].mxu0
      %v496 = vadd.f32 %v334, %v495
      %v497 = vpop.f32.mrb[0].mxu0
      %v498 = vpop.f32.mrb[0].mxu0
      %v499 = vadd.f32 %v334, %v498
      %v500 = vpop.f32.mrb[0].mxu0
      %501 = vmatprep.mubr.bf16.mxu0 0
      %502 = vmatmul.mubr.bf16.gmra.mrb[0].mxu0 %v359
      %v503 = vpop.f32.mrb[0].mxu0
      %v504 = vadd.f32 %v334, %v503
      %v505 = vpop.f32.mrb[0].mxu0
      %v506 = vpop.f32.mrb[0].mxu0
      %v507 = vadd.f32 %v334, %v506
      %v508 = vpop.f32.mrb[0].mxu0
      %509 = vmatprep.mubr.bf16.mxu0 0
      %510 = vmatmul.mubr.bf16.gmra.mrb[0].mxu0 %v362
      %v511 = vpop.f32.mrb[0].mxu0
      %v512 = vadd.f32 %v334, %v511
      %v513 = vpop.f32.mrb[0].mxu0
      %v514 = vpop.f32.mrb[0].mxu0
      %v515 = vadd.f32 %v334, %v514
      %v516 = vpop.f32.mrb[0].mxu0
      %517 = vmatprep.mubr.bf16.mxu0 0
      %518 = vmatmul.mubr.bf16.gmra.mrb[0].mxu0 %v365
      %v519 = vpop.f32.mrb[0].mxu0
      %v520 = vadd.f32 %v334, %v519
      %v521 = vpop.f32.mrb[0].mxu0
      %v522 = vpop.f32.mrb[0].mxu0
      %v523 = vadd.f32 %v334, %v522
      %v524 = vpop.f32.mrb[0].mxu0
      %525 = vmatprep.mubr.bf16.mxu0 0
      %526 = vmatmul.mubr.bf16.gmra.mrb[0].mxu0 %v368
      %v527 = vpop.f32.mrb[0].mxu0
      %v528 = vadd.f32 %v334, %v527
      %v529 = vpop.f32.mrb[0].mxu0
      %v530 = vpop.f32.mrb[0].mxu0
      %v531 = vadd.f32 %v334, %v530
      %v532 = vpop.f32.mrb[0].mxu0
      %533 = vmatprep.mubr.bf16.mxu0 0
      %534 = vmatmul.mubr.bf16.gmra.mrb[0].mxu0 %v371
      %v535 = vpop.f32.mrb[0].mxu0
      %v536 = vadd.f32 %v334, %v535
      %v537 = vpop.f32.mrb[0].mxu0
      %v538 = vpop.f32.mrb[0].mxu0
      %v539 = vadd.f32 %v334, %v538
      %v540 = vpop.f32.mrb[0].mxu0
      %541 = vmatprep.mubr.bf16.mxu0 0
      %542 = vmatmul.mubr.bf16.gmra.mrb[0].mxu0 %v374
      %v543 = vpop.f32.mrb[0].mxu0
      %v544 = vadd.f32 %v334, %v543
      %v545 = vpop.f32.mrb[0].mxu0
      %v546 = vpop.f32.mrb[0].mxu0
      %v547 = vadd.f32 %v334, %v546
      %v548 = vpop.f32.mrb[0].mxu0
      %549 = vmatprep.mubr.bf16.mxu0 0
      %550 = vmatmul.mubr.bf16.gmra.mrb[0].mxu0 %v377
      %v551 = vpop.f32.mrb[0].mxu0
      %v552 = vadd.f32 %v334, %v551
      %v553 = vpop.f32.mrb[0].mxu0
      %v554 = vpop.f32.mrb[0].mxu0
      %v555 = vadd.f32 %v334, %v554
      %v556 = vpop.f32.mrb[0].mxu0
      %557 = vmatprep.mubr.bf16.mxu0 0
      %558 = vmatmul.mubr.bf16.gmra.mrb[0].mxu0 %v380
      %v559 = vpop.f32.mrb[0].mxu0
      %v560 = vadd.f32 %v334, %v559
      %v561 = vpop.f32.mrb[0].mxu0
      %v562 = vpop.f32.mrb[0].mxu0
      %v563 = vadd.f32 %v334, %v562
      %v564 = vpop.f32.mrb[0].mxu0
      %565 = vmatprep.mubr.bf16.mxu0 0
      %566 = vmatmul.mubr.bf16.gmra.mrb[0].mxu0 %v383
      %v567 = vpop.f32.mrb[0].mxu0
      %v568 = vadd.f32 %v334, %v567
      %v569 = vpop.f32.mrb[0].mxu0
      %v570 = vpop.f32.mrb[0].mxu0
      %v571 = vadd.f32 %v334, %v570
      %v572 = vpop.f32.mrb[0].mxu0
      %573 = vmatprep.mubr.bf16.mxu0 0
      %574 = vmatmul.mubr.bf16.gmra.mrb[0].mxu0 %v386
      %v575 = vpop.f32.mrb[0].mxu0
      %v576 = vadd.f32 %v334, %v575
      %v577 = vpop.f32.mrb[0].mxu0
      %v578 = vpop.f32.mrb[0].mxu0
      %v579 = vadd.f32 %v334, %v578
      %v580 = vpop.f32.mrb[0].mxu0
      %581 = vmatprep.mubr.bf16.mxu0 0
      %582 = vmatmul.mubr.bf16.gmra.mrb[0].mxu0 %v389
      %v583 = vpop.f32.mrb[0].mxu0
      %v584 = vadd.f32 %v334, %v583
      %v585 = vpop.f32.mrb[0].mxu0
      %v586 = vpop.f32.mrb[0].mxu0
      %v587 = vadd.f32 %v334, %v586
      %v588 = vpop.f32.mrb[0].mxu0
      %589 = vmatprep.mubr.bf16.mxu0 0
      %590 = vmatmul.mubr.bf16.gmra.mrb[0].mxu0 %v392
      %v591 = vpop.f32.mrb[0].mxu0
      %v592 = vadd.f32 %v334, %v591
      %v593 = vpop.f32.mrb[0].mxu0
      %v594 = vpop.f32.mrb[0].mxu0
      %v595 = vadd.f32 %v334, %v594
      %v596 = vpop.f32.mrb[0].mxu0
      %597 = vmatprep.mubr.bf16.mxu0 0
      %598 = vmatmul.mubr.bf16.gmra.mrb[0].mxu0 %v395
      %v599 = vpop.f32.mrb[0].mxu0
      %v600 = vadd.f32 %v334, %v599
      %v601 = vpop.f32.mrb[0].mxu0
      %v602 = vpop.f32.mrb[0].mxu0
      %v603 = vadd.f32 %v334, %v602
      %v604 = vpop.f32.mrb[0].mxu0
      %605 = vmatprep.mubr.bf16.mxu0 0
      %606 = vmatmul.mubr.bf16.gmra.mrb[0].mxu0 %v398
      %v607 = vpop.f32.mrb[0].mxu0
      %v608 = vadd.f32 %v334, %v607
      %v609 = vpop.f32.mrb[0].mxu0
      %v610 = vpop.f32.mrb[0].mxu0
      %v611 = vadd.f32 %v334, %v610
      %v612 = vpop.f32.mrb[0].mxu0
      %613 = vmatprep.mubr.bf16.mxu0 0
      %614 = vmatmul.mubr.bf16.gmra.mrb[0].mxu0 %v401
      %v615 = vpop.f32.mrb[0].mxu0
      %v616 = vadd.f32 %v334, %v615
      %v617 = vpop.f32.mrb[0].mxu0
      %v618 = vpop.f32.mrb[0].mxu0
      %v619 = vadd.f32 %v334, %v618
      %v620 = vpop.f32.mrb[0].mxu0
      %621 = vmatprep.mubr.bf16.mxu0 0
      %622 = vmatmul.mubr.bf16.gmra.mrb[0].mxu0 %v404
      %v623 = vpop.f32.mrb[0].mxu0
      %v624 = vadd.f32 %v334, %v623
      %v625 = vpop.f32.mrb[0].mxu0
      %v626 = vpop.f32.mrb[0].mxu0
      %v627 = vadd.f32 %v334, %v626
      %v628 = vpop.f32.mrb[0].mxu0
      %629 = vmatprep.mubr.bf16.mxu0 0
      %630 = vmatmul.mubr.bf16.gmra.mrb[0].mxu0 %v407
      %v631 = vpop.f32.mrb[0].mxu0
      %v632 = vadd.f32 %v334, %v631
      %v633 = vpop.f32.mrb[0].mxu0
      %v634 = vpop.f32.mrb[0].mxu0
      %v635 = vadd.f32 %v334, %v634
      %v636 = vpop.f32.mrb[0].mxu0
      %637 = vmatprep.mubr.bf16.mxu0 0
      %638 = vmatmul.mubr.bf16.gmra.mrb[0].mxu0 %v410
      %v639 = vpop.f32.mrb[0].mxu0
      %v640 = vadd.f32 %v334, %v639
      %v641 = vpop.f32.mrb[0].mxu0
      %v642 = vpop.f32.mrb[0].mxu0
      %v643 = vadd.f32 %v334, %v642
      %v644 = vpop.f32.mrb[0].mxu0
      %645 = vmatprep.mubr.bf16.mxu0 0
      %646 = vmatmul.mubr.bf16.gmra.mrb[0].mxu0 %v413
      %v647 = vpop.f32.mrb[0].mxu0
      %v648 = vadd.f32 %v334, %v647
      %v649 = vpop.f32.mrb[0].mxu0
      %v650 = vpop.f32.mrb[0].mxu0
      %v651 = vadd.f32 %v334, %v650
      %v652 = vpop.f32.mrb[0].mxu0
      %653 = vmatprep.mubr.bf16.mxu0 0
      %654 = vmatmul.mubr.bf16.gmra.mrb[0].mxu0 %v416
      %v655 = vpop.f32.mrb[0].mxu0
      %v656 = vadd.f32 %v334, %v655
      %v657 = vpop.f32.mrb[0].mxu0
      %v658 = vpop.f32.mrb[0].mxu0
      %v659 = vadd.f32 %v334, %v658
      %v660 = vpop.f32.mrb[0].mxu0
      %661 = vmatprep.mubr.bf16.mxu0 0
      %662 = vmatmul.mubr.bf16.gmra.mrb[0].mxu0 %v419
      %v663 = vpop.f32.mrb[0].mxu0
      %v664 = vadd.f32 %v334, %v663
      %v665 = vpop.f32.mrb[0].mxu0
      %v666 = vpop.f32.mrb[0].mxu0
      %v667 = vadd.f32 %v334, %v666
      %v668 = vpop.f32.mrb[0].mxu0
      %669 = vmatprep.mubr.bf16.mxu0 0
      %670 = vmatmul.mubr.bf16.gmra.mrb[0].mxu0 %v422
      %v671 = vpop.f32.mrb[0].mxu0
      %v672 = vadd.f32 %v334, %v671
      %v673 = vpop.f32.mrb[0].mxu0
      %v674 = vpop.f32.mrb[0].mxu0
      %v675 = vadd.f32 %v334, %v674
      %v676 = vpop.f32.mrb[0].mxu0
      %677 = vmatprep.mubr.bf16.mxu0 0
      %678 = vmatmul.mubr.bf16.gmra.mrb[0].mxu0 %v425
      %v679 = vpop.f32.mrb[0].mxu0
      %v680 = vadd.f32 %v334, %v679
      %v681 = vpop.f32.mrb[0].mxu0
      %v682 = vpop.f32.mrb[0].mxu0
      %v683 = vadd.f32 %v334, %v682
      %v684 = vpop.f32.mrb[0].mxu0
      %685 = vmatprep.mubr.bf16.mxu0 0
      %686 = vmatmul.mubr.bf16.gmra.mrb[0].mxu0 %v428
      %v687 = vpop.f32.mrb[0].mxu0
      %v688 = vadd.f32 %v334, %v687
      %v689 = vpop.f32.mrb[0].mxu0
      %v690 = vpop.f32.mrb[0].mxu0
      %v691 = vadd.f32 %v334, %v690
      %v692 = vpop.f32.mrb[0].mxu0
      %693 = vmatprep.mubr.bf16.mxu0 0
      %694 = vmatmul.mubr.bf16.gmra.mrb[0].mxu0 %v431
      %v695 = vpop.f32.mrb[0].mxu0
      %v696 = vadd.f32 %v334, %v695
      %v697 = vpop.f32.mrb[0].mxu0
      %v698 = vpop.f32.mrb[0].mxu0
      %v699 = vadd.f32 %v334, %v698
      %v700 = vpop.f32.mrb[0].mxu0
      %701 = vmatprep.mubr.bf16.mxu0 0
      %702 = vmatmul.mubr.bf16.gmra.mrb[0].mxu0 %v434
      %v703 = vpop.f32.mrb[0].mxu0
      %v704 = vadd.f32 %v334, %v703
      %v705 = vpop.f32.mrb[0].mxu0
      %v706 = vpop.f32.mrb[0].mxu0
      %v707 = vadd.f32 %v334, %v706
      %v708 = vpop.f32.mrb[0].mxu0
      %709 = vmatprep.mubr.bf16.mxu0 0
      %710 = vmatmul.mubr.bf16.gmra.mrb[0].mxu0 %v437
      %v711 = vpop.f32.mrb[0].mxu0
      %v712 = vadd.f32 %v334, %v711
      %v713 = vpop.f32.mrb[0].mxu0
      %v714 = vpop.f32.mrb[0].mxu0
      %v715 = vadd.f32 %v334, %v714
      %v716 = vpop.f32.mrb[0].mxu0
      %717 = vmatprep.mubr.bf16.mxu0 0
      %718 = vmatmul.mubr.bf16.gmra.mrb[0].mxu0 %v440
      %v719 = vpop.f32.mrb[0].mxu0
      %v720 = vadd.f32 %v334, %v719
      %v721 = vpop.f32.mrb[0].mxu0
      %v722 = vpop.f32.mrb[0].mxu0
      %v723 = vadd.f32 %v334, %v722
      %v724 = vpop.f32.mrb[0].mxu0
      %725 = vmatprep.mubr.bf16.mxu0 0
      %726 = vmatmul.mubr.bf16.gmra.mrb[0].mxu0 %v443
      %v727 = vpop.f32.mrb[0].mxu0
      %v728 = vadd.f32 %v334, %v727
      %v729 = vpop.f32.mrb[0].mxu0
      %v730 = vpop.f32.mrb[0].mxu0
      %v731 = vadd.f32 %v334, %v730
      %v732 = vpop.f32.mrb[0].mxu0
      %733 = vdwg.mxu0
      %v734 = vmax.f32 %v480, 0.0
      %v735 = vmax.f32 %v483, 0.0
      %v736 = vmax.f32 %v488, 0.0
      %v737 = vmax.f32 %v491, 0.0
      %v738 = vmax.f32 %v496, 0.0
      %v739 = vmax.f32 %v499, 0.0
      %v740 = vmax.f32 %v504, 0.0
      %v741 = vmax.f32 %v507, 0.0
      %v742 = vmax.f32 %v512, 0.0
      %v743 = vmax.f32 %v515, 0.0
      %v744 = vmax.f32 %v520, 0.0
      %v745 = vmax.f32 %v523, 0.0
      %v746 = vmax.f32 %v528, 0.0
      %v747 = vmax.f32 %v531, 0.0
      %v748 = vmax.f32 %v536, 0.0
      %v749 = vmax.f32 %v539, 0.0
      %v750 = vmax.f32 %v544, 0.0
      %v751 = vmax.f32 %v547, 0.0
      %v752 = vmax.f32 %v552, 0.0
      %v753 = vmax.f32 %v555, 0.0
      %v754 = vmax.f32 %v560, 0.0
      %v755 = vmax.f32 %v563, 0.0
      %v756 = vmax.f32 %v568, 0.0
      %v757 = vmax.f32 %v571, 0.0
      %v758 = vmax.f32 %v576, 0.0
      %v759 = vmax.f32 %v579, 0.0
      %v760 = vmax.f32 %v584, 0.0
      %v761 = vmax.f32 %v587, 0.0
      %v762 = vmax.f32 %v592, 0.0
      %v763 = vmax.f32 %v595, 0.0
      %v764 = vmax.f32 %v600, 0.0
      %v765 = vmax.f32 %v603, 0.0
      %v766 = vmax.f32 %v608, 0.0
      %v767 = vmax.f32 %v611, 0.0
      %v768 = vmax.f32 %v616, 0.0
      %v769 = vmax.f32 %v619, 0.0
      %v770 = vmax.f32 %v624, 0.0
      %v771 = vmax.f32 %v627, 0.0
      %v772 = vmax.f32 %v632, 0.0
      %v773 = vmax.f32 %v635, 0.0
      %v774 = vmax.f32 %v640, 0.0
      %v775 = vmax.f32 %v643, 0.0
      %v776 = vmax.f32 %v648, 0.0
      %v777 = vmax.f32 %v651, 0.0
      %v778 = vmax.f32 %v656, 0.0
      %v779 = vmax.f32 %v659, 0.0
      %v780 = vmax.f32 %v664, 0.0
      %v781 = vmax.f32 %v667, 0.0
      %v782 = vmax.f32 %v672, 0.0
      %v783 = vmax.f32 %v675, 0.0
      %v784 = vmax.f32 %v680, 0.0
      %v785 = vmax.f32 %v683, 0.0
      %v786 = vmax.f32 %v688, 0.0
      %v787 = vmax.f32 %v691, 0.0
      %v788 = vmax.f32 %v696, 0.0
      %v789 = vmax.f32 %v699, 0.0
      %v790 = vmax.f32 %v704, 0.0
      %v791 = vmax.f32 %v707, 0.0
      %v792 = vmax.f32 %v712, 0.0
      %v793 = vmax.f32 %v715, 0.0
      %v794 = vmax.f32 %v720, 0.0
      %v795 = vmax.f32 %v723, 0.0
      %v796 = vmax.f32 %v728, 0.0
      %v797 = vmax.f32 %v731, 0.0
      %v798 = vpack.c.bf16 %v735, %v734
      %v799 = vpack.c.bf16 %v737, %v736
      %v800 = vpack.c.bf16 %v739, %v738
      %v801 = vpack.c.bf16 %v741, %v740
      %v802 = vpack.c.bf16 %v743, %v742
      %v803 = vpack.c.bf16 %v745, %v744
      %v804 = vpack.c.bf16 %v747, %v746
      %v805 = vpack.c.bf16 %v749, %v748
      %v806 = vpack.c.bf16 %v751, %v750
      %v807 = vpack.c.bf16 %v753, %v752
      %v808 = vpack.c.bf16 %v755, %v754
      %v809 = vpack.c.bf16 %v757, %v756
      %v810 = vpack.c.bf16 %v759, %v758
      %v811 = vpack.c.bf16 %v761, %v760
      %v812 = vpack.c.bf16 %v763, %v762
      %v813 = vpack.c.bf16 %v765, %v764
      %v814 = vpack.c.bf16 %v767, %v766
      %v815 = vpack.c.bf16 %v769, %v768
      %v816 = vpack.c.bf16 %v771, %v770
      %v817 = vpack.c.bf16 %v773, %v772
      %v818 = vpack.c.bf16 %v775, %v774
      %v819 = vpack.c.bf16 %v777, %v776
      %v820 = vpack.c.bf16 %v779, %v778
      %v821 = vpack.c.bf16 %v781, %v780
      %v822 = vpack.c.bf16 %v783, %v782
      %v823 = vpack.c.bf16 %v785, %v784
      %v824 = vpack.c.bf16 %v787, %v786
      %v825 = vpack.c.bf16 %v789, %v788
      %v826 = vpack.c.bf16 %v791, %v790
      %v827 = vpack.c.bf16 %v793, %v792
      %v828 = vpack.c.bf16 %v795, %v794
      %v829 = vpack.c.bf16 %v797, %v796
      %v830 = vld [vmem:[%s3] sm:$0xf]
      %v831 = vld [vmem:[%s3 + $0x4] sm:$0xf]
      %v832 = vld [vmem:[%s3 + $0x8] sm:$0xf]
      %v833 = vld [vmem:[%s3 + $0xc] sm:$0xf]
      %v834 = vld [vmem:[%s3 + $0x10] sm:$0xf]
      %v835 = vld [vmem:[%s3 + $0x14] sm:$0xf]
      %v836 = vld [vmem:[%s3 + $0x18] sm:$0xf]
      %v837 = vld [vmem:[%s3 + $0x1c] sm:$0xf]
      %v838 = vld [vmem:[%s3 + $0x20] sm:$0xf]
      %v839 = vld [vmem:[%s3 + $0x24] sm:$0xf]
      %v840 = vld [vmem:[%s3 + $0x28] sm:$0xf]
      %v841 = vld [vmem:[%s3 + $0x2c] sm:$0xf]
      %v842 = vld [vmem:[%s3 + $0x30] sm:$0xf]
      %v843 = vld [vmem:[%s3 + $0x34] sm:$0xf]
      %v844 = vld [vmem:[%s3 + $0x38] sm:$0xf]
      %v845 = vld [vmem:[%s3 + $0x3c] sm:$0xf]
      %v846 = vld [vmem:[%s4] sm:$0x1]
      %v848 = vlaneseq
      %v849 = vshrl.u32 %v848, 7
      %v850 = vsub.s32 0, %v849
      %v851 = vrot.slane %v846, %v850
      %v869 = vunpack.c.l.b16 %v830
      %v870 = vunpack.c.l.b16 %v831
      %v871 = vunpack.c.l.b16 %v832
      %v872 = vunpack.c.l.b16 %v833
      %v873 = vunpack.c.l.b16 %v834
      %v874 = vunpack.c.l.b16 %v835
      %v875 = vunpack.c.l.b16 %v836
      %v876 = vunpack.c.l.b16 %v837
      %v877 = vunpack.c.l.b16 %v838
      %v878 = vunpack.c.l.b16 %v839
      %v879 = vunpack.c.l.b16 %v840
      %v880 = vunpack.c.l.b16 %v841
      %v881 = vunpack.c.l.b16 %v842
      %v882 = vunpack.c.l.b16 %v843
      %v883 = vunpack.c.l.b16 %v844
      %v884 = vunpack.c.l.b16 %v845
      %v885 = vpack.c.b16 %v870, %v869
      %v886 = vpack.c.b16 %v872, %v871
      %v887 = vpack.c.b16 %v874, %v873
      %v888 = vpack.c.b16 %v876, %v875
      %v889 = vpack.c.b16 %v878, %v877
      %v890 = vpack.c.b16 %v880, %v879
      %v891 = vpack.c.b16 %v882, %v881
      %v892 = vpack.c.b16 %v884, %v883
      %901 = vmatprep.subr.bf16.mxu0 0
      %902 = vmatpush1.bf16.msra.mxu0 %v885
      %903 = vmatprep.subr.bf16.mxu0 0
      %904 = vmatpush1.bf16.msra.mxu0 %v886
      %905 = vmatprep.subr.bf16.mxu0 0
      %906 = vmatpush1.bf16.msra.mxu0 %v887
      %907 = vmatprep.subr.bf16.mxu0 0
      %908 = vmatpush1.bf16.msra.mxu0 %v888
      %909 = vmatprep.subr.bf16.mxu0 0
      %910 = vmatpush1.bf16.msra.mxu0 %v889
      %911 = vmatprep.subr.bf16.mxu0 0
      %912 = vmatpush1.bf16.msra.mxu0 %v890
      %913 = vmatprep.subr.bf16.mxu0 0
      %914 = vmatpush1.bf16.msra.mxu0 %v891
      %915 = vmatprep.subr.bf16.mxu0 0
      %916 = vmatpush1.bf16.msra.mxu0 %v892
      %917 = vmatprep.subr.bf16.mxu0 0
      %918 = vmatpush1.bf16.msra.mxu0 0
      %919 = vmatprep.subr.bf16.mxu0 0
      %920 = vmatpush1.bf16.msra.mxu0 0
      %921 = vmatprep.subr.bf16.mxu0 0
      %922 = vmatpush1.bf16.msra.mxu0 0
      %923 = vmatprep.subr.bf16.mxu0 0
      %924 = vmatpush1.bf16.msra.mxu0 0
      %925 = vmatprep.subr.bf16.mxu0 0
      %926 = vmatpush1.bf16.msra.mxu0 0
      %927 = vmatprep.subr.bf16.mxu0 0
      %928 = vmatpush1.bf16.msra.mxu0 0
      %929 = vmatprep.subr.bf16.mxu0 0
      %930 = vmatpush1.bf16.msra.mxu0 0
      %931 = vmatprep.subr.bf16.mxu0 0
      %932 = vmatpush1.bf16.msra.mxu0 0
      %933 = vmatprep.mubr.bf16.mxu0 0
      %934 = vmatmul.mubr.bf16.gmra.mrb[0].mxu0 %v798
      %v935 = vpop.f32.mrb[0].mxu0
      %v936 = vadd.f32 %v851, %v935
      %v937 = vpop.f32.mrb[0].mxu0
      %v938 = vpop.f32.mrb[0].mxu0
      %v939 = vadd.f32 %v851, %v938
      %v940 = vpop.f32.mrb[0].mxu0
      %941 = vmatprep.mubr.bf16.mxu0 0
      %942 = vmatmul.mubr.bf16.gmra.mrb[0].mxu0 %v799
      %v943 = vpop.f32.mrb[0].mxu0
      %v944 = vadd.f32 %v851, %v943
      %v945 = vpop.f32.mrb[0].mxu0
      %v946 = vpop.f32.mrb[0].mxu0
      %v947 = vadd.f32 %v851, %v946
      %v948 = vpop.f32.mrb[0].mxu0
      %949 = vmatprep.mubr.bf16.mxu0 0
      %950 = vmatmul.mubr.bf16.gmra.mrb[0].mxu0 %v800
      %v951 = vpop.f32.mrb[0].mxu0
      %v952 = vadd.f32 %v851, %v951
      %v953 = vpop.f32.mrb[0].mxu0
      %v954 = vpop.f32.mrb[0].mxu0
      %v955 = vadd.f32 %v851, %v954
      %v956 = vpop.f32.mrb[0].mxu0
      %957 = vmatprep.mubr.bf16.mxu0 0
      %958 = vmatmul.mubr.bf16.gmra.mrb[0].mxu0 %v801
      %v959 = vpop.f32.mrb[0].mxu0
      %v960 = vadd.f32 %v851, %v959
      %v961 = vpop.f32.mrb[0].mxu0
      %v962 = vpop.f32.mrb[0].mxu0
      %v963 = vadd.f32 %v851, %v962
      %v964 = vpop.f32.mrb[0].mxu0
      %965 = vmatprep.mubr.bf16.mxu0 0
      %966 = vmatmul.mubr.bf16.gmra.mrb[0].mxu0 %v802
      %v967 = vpop.f32.mrb[0].mxu0
      %v968 = vadd.f32 %v851, %v967
      %v969 = vpop.f32.mrb[0].mxu0
      %v970 = vpop.f32.mrb[0].mxu0
      %v971 = vadd.f32 %v851, %v970
      %v972 = vpop.f32.mrb[0].mxu0
      %973 = vmatprep.mubr.bf16.mxu0 0
      %974 = vmatmul.mubr.bf16.gmra.mrb[0].mxu0 %v803
      %v975 = vpop.f32.mrb[0].mxu0
      %v976 = vadd.f32 %v851, %v975
      %v977 = vpop.f32.mrb[0].mxu0
      %v978 = vpop.f32.mrb[0].mxu0
      %v979 = vadd.f32 %v851, %v978
      %v980 = vpop.f32.mrb[0].mxu0
      %981 = vmatprep.mubr.bf16.mxu0 0
      %982 = vmatmul.mubr.bf16.gmra.mrb[0].mxu0 %v804
      %v983 = vpop.f32.mrb[0].mxu0
      %v984 = vadd.f32 %v851, %v983
      %v985 = vpop.f32.mrb[0].mxu0
      %v986 = vpop.f32.mrb[0].mxu0
      %v987 = vadd.f32 %v851, %v986
      %v988 = vpop.f32.mrb[0].mxu0
      %989 = vmatprep.mubr.bf16.mxu0 0
      %990 = vmatmul.mubr.bf16.gmra.mrb[0].mxu0 %v805
      %v991 = vpop.f32.mrb[0].mxu0
      %v992 = vadd.f32 %v851, %v991
      %v993 = vpop.f32.mrb[0].mxu0
      %v994 = vpop.f32.mrb[0].mxu0
      %v995 = vadd.f32 %v851, %v994
      %v996 = vpop.f32.mrb[0].mxu0
      %997 = vmatprep.mubr.bf16.mxu0 0
      %998 = vmatmul.mubr.bf16.gmra.mrb[0].mxu0 %v806
      %v999 = vpop.f32.mrb[0].mxu0
      %v1000 = vadd.f32 %v851, %v999
      %v1001 = vpop.f32.mrb[0].mxu0
      %v1002 = vpop.f32.mrb[0].mxu0
      %v1003 = vadd.f32 %v851, %v1002
      %v1004 = vpop.f32.mrb[0].mxu0
      %1005 = vmatprep.mubr.bf16.mxu0 0
      %1006 = vmatmul.mubr.bf16.gmra.mrb[0].mxu0 %v807
      %v1007 = vpop.f32.mrb[0].mxu0
      %v1008 = vadd.f32 %v851, %v1007
      %v1009 = vpop.f32.mrb[0].mxu0
      %v1010 = vpop.f32.mrb[0].mxu0
      %v1011 = vadd.f32 %v851, %v1010
      %v1012 = vpop.f32.mrb[0].mxu0
      %1013 = vmatprep.mubr.bf16.mxu0 0
      %1014 = vmatmul.mubr.bf16.gmra.mrb[0].mxu0 %v808
      %v1015 = vpop.f32.mrb[0].mxu0
      %v1016 = vadd.f32 %v851, %v1015
      %v1017 = vpop.f32.mrb[0].mxu0
      %v1018 = vpop.f32.mrb[0].mxu0
      %v1019 = vadd.f32 %v851, %v1018
      %v1020 = vpop.f32.mrb[0].mxu0
      %1021 = vmatprep.mubr.bf16.mxu0 0
      %1022 = vmatmul.mubr.bf16.gmra.mrb[0].mxu0 %v809
      %v1023 = vpop.f32.mrb[0].mxu0
      %v1024 = vadd.f32 %v851, %v1023
      %v1025 = vpop.f32.mrb[0].mxu0
      %v1026 = vpop.f32.mrb[0].mxu0
      %v1027 = vadd.f32 %v851, %v1026
      %v1028 = vpop.f32.mrb[0].mxu0
      %1029 = vmatprep.mubr.bf16.mxu0 0
      %1030 = vmatmul.mubr.bf16.gmra.mrb[0].mxu0 %v810
      %v1031 = vpop.f32.mrb[0].mxu0
      %v1032 = vadd.f32 %v851, %v1031
      %v1033 = vpop.f32.mrb[0].mxu0
      %v1034 = vpop.f32.mrb[0].mxu0
      %v1035 = vadd.f32 %v851, %v1034
      %v1036 = vpop.f32.mrb[0].mxu0
      %1037 = vmatprep.mubr.bf16.mxu0 0
      %1038 = vmatmul.mubr.bf16.gmra.mrb[0].mxu0 %v811
      %v1039 = vpop.f32.mrb[0].mxu0
      %v1040 = vadd.f32 %v851, %v1039
      %v1041 = vpop.f32.mrb[0].mxu0
      %v1042 = vpop.f32.mrb[0].mxu0
      %v1043 = vadd.f32 %v851, %v1042
      %v1044 = vpop.f32.mrb[0].mxu0
      %1045 = vmatprep.mubr.bf16.mxu0 0
      %1046 = vmatmul.mubr.bf16.gmra.mrb[0].mxu0 %v812
      %v1047 = vpop.f32.mrb[0].mxu0
      %v1048 = vadd.f32 %v851, %v1047
      %v1049 = vpop.f32.mrb[0].mxu0
      %v1050 = vpop.f32.mrb[0].mxu0
      %v1051 = vadd.f32 %v851, %v1050
      %v1052 = vpop.f32.mrb[0].mxu0
      %1053 = vmatprep.mubr.bf16.mxu0 0
      %1054 = vmatmul.mubr.bf16.gmra.mrb[0].mxu0 %v813
      %v1055 = vpop.f32.mrb[0].mxu0
      %v1056 = vadd.f32 %v851, %v1055
      %v1057 = vpop.f32.mrb[0].mxu0
      %v1058 = vpop.f32.mrb[0].mxu0
      %v1059 = vadd.f32 %v851, %v1058
      %v1060 = vpop.f32.mrb[0].mxu0
      %1061 = vmatprep.mubr.bf16.mxu0 0
      %1062 = vmatmul.mubr.bf16.gmra.mrb[0].mxu0 %v814
      %v1063 = vpop.f32.mrb[0].mxu0
      %v1064 = vadd.f32 %v851, %v1063
      %v1065 = vpop.f32.mrb[0].mxu0
      %v1066 = vpop.f32.mrb[0].mxu0
      %v1067 = vadd.f32 %v851, %v1066
      %v1068 = vpop.f32.mrb[0].mxu0
      %1069 = vmatprep.mubr.bf16.mxu0 0
      %1070 = vmatmul.mubr.bf16.gmra.mrb[0].mxu0 %v815
      %v1071 = vpop.f32.mrb[0].mxu0
      %v1072 = vadd.f32 %v851, %v1071
      %v1073 = vpop.f32.mrb[0].mxu0
      %v1074 = vpop.f32.mrb[0].mxu0
      %v1075 = vadd.f32 %v851, %v1074
      %v1076 = vpop.f32.mrb[0].mxu0
      %1077 = vmatprep.mubr.bf16.mxu0 0
      %1078 = vmatmul.mubr.bf16.gmra.mrb[0].mxu0 %v816
      %v1079 = vpop.f32.mrb[0].mxu0
      %v1080 = vadd.f32 %v851, %v1079
      %v1081 = vpop.f32.mrb[0].mxu0
      %v1082 = vpop.f32.mrb[0].mxu0
      %v1083 = vadd.f32 %v851, %v1082
      %v1084 = vpop.f32.mrb[0].mxu0
      %1085 = vmatprep.mubr.bf16.mxu0 0
      %1086 = vmatmul.mubr.bf16.gmra.mrb[0].mxu0 %v817
      %v1087 = vpop.f32.mrb[0].mxu0
      %v1088 = vadd.f32 %v851, %v1087
      %v1089 = vpop.f32.mrb[0].mxu0
      %v1090 = vpop.f32.mrb[0].mxu0
      %v1091 = vadd.f32 %v851, %v1090
      %v1092 = vpop.f32.mrb[0].mxu0
      %1093 = vmatprep.mubr.bf16.mxu0 0
      %1094 = vmatmul.mubr.bf16.gmra.mrb[0].mxu0 %v818
      %v1095 = vpop.f32.mrb[0].mxu0
      %v1096 = vadd.f32 %v851, %v1095
      %v1097 = vpop.f32.mrb[0].mxu0
      %v1098 = vpop.f32.mrb[0].mxu0
      %v1099 = vadd.f32 %v851, %v1098
      %v1100 = vpop.f32.mrb[0].mxu0
      %1101 = vmatprep.mubr.bf16.mxu0 0
      %1102 = vmatmul.mubr.bf16.gmra.mrb[0].mxu0 %v819
      %v1103 = vpop.f32.mrb[0].mxu0
      %v1104 = vadd.f32 %v851, %v1103
      %v1105 = vpop.f32.mrb[0].mxu0
      %v1106 = vpop.f32.mrb[0].mxu0
      %v1107 = vadd.f32 %v851, %v1106
      %v1108 = vpop.f32.mrb[0].mxu0
      %1109 = vmatprep.mubr.bf16.mxu0 0
      %1110 = vmatmul.mubr.bf16.gmra.mrb[0].mxu0 %v820
      %v1111 = vpop.f32.mrb[0].mxu0
      %v1112 = vadd.f32 %v851, %v1111
      %v1113 = vpop.f32.mrb[0].mxu0
      %v1114 = vpop.f32.mrb[0].mxu0
      %v1115 = vadd.f32 %v851, %v1114
      %v1116 = vpop.f32.mrb[0].mxu0
      %1117 = vmatprep.mubr.bf16.mxu0 0
      %1118 = vmatmul.mubr.bf16.gmra.mrb[0].mxu0 %v821
      %v1119 = vpop.f32.mrb[0].mxu0
      %v1120 = vadd.f32 %v851, %v1119
      %v1121 = vpop.f32.mrb[0].mxu0
      %v1122 = vpop.f32.mrb[0].mxu0
      %v1123 = vadd.f32 %v851, %v1122
      %v1124 = vpop.f32.mrb[0].mxu0
      %1125 = vmatprep.mubr.bf16.mxu0 0
      %1126 = vmatmul.mubr.bf16.gmra.mrb[0].mxu0 %v822
      %v1127 = vpop.f32.mrb[0].mxu0
      %v1128 = vadd.f32 %v851, %v1127
      %v1129 = vpop.f32.mrb[0].mxu0
      %v1130 = vpop.f32.mrb[0].mxu0
      %v1131 = vadd.f32 %v851, %v1130
      %v1132 = vpop.f32.mrb[0].mxu0
      %1133 = vmatprep.mubr.bf16.mxu0 0
      %1134 = vmatmul.mubr.bf16.gmra.mrb[0].mxu0 %v823
      %v1135 = vpop.f32.mrb[0].mxu0
      %v1136 = vadd.f32 %v851, %v1135
      %v1137 = vpop.f32.mrb[0].mxu0
      %v1138 = vpop.f32.mrb[0].mxu0
      %v1139 = vadd.f32 %v851, %v1138
      %v1140 = vpop.f32.mrb[0].mxu0
      %1141 = vmatprep.mubr.bf16.mxu0 0
      %1142 = vmatmul.mubr.bf16.gmra.mrb[0].mxu0 %v824
      %v1143 = vpop.f32.mrb[0].mxu0
      %v1144 = vadd.f32 %v851, %v1143
      %v1145 = vpop.f32.mrb[0].mxu0
      %v1146 = vpop.f32.mrb[0].mxu0
      %v1147 = vadd.f32 %v851, %v1146
      %v1148 = vpop.f32.mrb[0].mxu0
      %1149 = vmatprep.mubr.bf16.mxu0 0
      %1150 = vmatmul.mubr.bf16.gmra.mrb[0].mxu0 %v825
      %v1151 = vpop.f32.mrb[0].mxu0
      %v1152 = vadd.f32 %v851, %v1151
      %v1153 = vpop.f32.mrb[0].mxu0
      %v1154 = vpop.f32.mrb[0].mxu0
      %v1155 = vadd.f32 %v851, %v1154
      %v1156 = vpop.f32.mrb[0].mxu0
      %1157 = vmatprep.mubr.bf16.mxu0 0
      %1158 = vmatmul.mubr.bf16.gmra.mrb[0].mxu0 %v826
      %v1159 = vpop.f32.mrb[0].mxu0
      %v1160 = vadd.f32 %v851, %v1159
      %v1161 = vpop.f32.mrb[0].mxu0
      %v1162 = vpop.f32.mrb[0].mxu0
      %v1163 = vadd.f32 %v851, %v1162
      %v1164 = vpop.f32.mrb[0].mxu0
      %1165 = vmatprep.mubr.bf16.mxu0 0
      %1166 = vmatmul.mubr.bf16.gmra.mrb[0].mxu0 %v827
      %v1167 = vpop.f32.mrb[0].mxu0
      %v1168 = vadd.f32 %v851, %v1167
      %v1169 = vpop.f32.mrb[0].mxu0
      %v1170 = vpop.f32.mrb[0].mxu0
      %v1171 = vadd.f32 %v851, %v1170
      %v1172 = vpop.f32.mrb[0].mxu0
      %1173 = vmatprep.mubr.bf16.mxu0 0
      %1174 = vmatmul.mubr.bf16.gmra.mrb[0].mxu0 %v828
      %v1175 = vpop.f32.mrb[0].mxu0
      %v1176 = vadd.f32 %v851, %v1175
      %v1177 = vpop.f32.mrb[0].mxu0
      %v1178 = vpop.f32.mrb[0].mxu0
      %v1179 = vadd.f32 %v851, %v1178
      %v1180 = vpop.f32.mrb[0].mxu0
      %1181 = vmatprep.mubr.bf16.mxu0 0
      %1182 = vmatmul.mubr.bf16.gmra.mrb[0].mxu0 %v829
      %v1183 = vpop.f32.mrb[0].mxu0
      %v1184 = vadd.f32 %v851, %v1183
      %v1185 = vpop.f32.mrb[0].mxu0
      %v1186 = vpop.f32.mrb[0].mxu0
      %v1187 = vadd.f32 %v851, %v1186
      %v1188 = vpop.f32.mrb[0].mxu0
      %1189 = vdwg.mxu0
      %vm1190 = vcmask 130048
      %1191 = vst.msk [vmem:[%s226] sm:$0xff] %vm1190, %v936
      %1192 = vst.msk [vmem:[%s226 + $0x8] sm:$0xff] %vm1190, %v939
      %1193 = vst.msk [vmem:[%s226 + $0x10] sm:$0xff] %vm1190, %v944
      %1194 = vst.msk [vmem:[%s226 + $0x18] sm:$0xff] %vm1190, %v947
      %1195 = vst.msk [vmem:[%s226 + $0x20] sm:$0xff] %vm1190, %v952
      %1196 = vst.msk [vmem:[%s226 + $0x28] sm:$0xff] %vm1190, %v955
      %1197 = vst.msk [vmem:[%s226 + $0x30] sm:$0xff] %vm1190, %v960
      %1198 = vst.msk [vmem:[%s226 + $0x38] sm:$0xff] %vm1190, %v963
      %1199 = vst.msk [vmem:[%s226 + $0x40] sm:$0xff] %vm1190, %v968
      %1200 = vst.msk [vmem:[%s226 + $0x48] sm:$0xff] %vm1190, %v971
      %1201 = vst.msk [vmem:[%s226 + $0x50] sm:$0xff] %vm1190, %v976
      %1202 = vst.msk [vmem:[%s226 + $0x58] sm:$0xff] %vm1190, %v979
      %1203 = vst.msk [vmem:[%s226 + $0x60] sm:$0xff] %vm1190, %v984
      %1204 = vst.msk [vmem:[%s226 + $0x68] sm:$0xff] %vm1190, %v987
      %1205 = vst.msk [vmem:[%s226 + $0x70] sm:$0xff] %vm1190, %v992
      %1206 = vst.msk [vmem:[%s226 + $0x78] sm:$0xff] %vm1190, %v995
      %1207 = vst.msk [vmem:[%s226 + $0x80] sm:$0xff] %vm1190, %v1000
      %1208 = vst.msk [vmem:[%s226 + $0x88] sm:$0xff] %vm1190, %v1003
      %1209 = vst.msk [vmem:[%s226 + $0x90] sm:$0xff] %vm1190, %v1008
      %1210 = vst.msk [vmem:[%s226 + $0x98] sm:$0xff] %vm1190, %v1011
      %1211 = vst.msk [vmem:[%s226 + $0xa0] sm:$0xff] %vm1190, %v1016
      %1212 = vst.msk [vmem:[%s226 + $0xa8] sm:$0xff] %vm1190, %v1019
      %1213 = vst.msk [vmem:[%s226 + $0xb0] sm:$0xff] %vm1190, %v1024
      %1214 = vst.msk [vmem:[%s226 + $0xb8] sm:$0xff] %vm1190, %v1027
      %1215 = vst.msk [vmem:[%s226 + $0xc0] sm:$0xff] %vm1190, %v1032
      %1216 = vst.msk [vmem:[%s226 + $0xc8] sm:$0xff] %vm1190, %v1035
      %1217 = vst.msk [vmem:[%s226 + $0xd0] sm:$0xff] %vm1190, %v1040
      %1218 = vst.msk [vmem:[%s226 + $0xd8] sm:$0xff] %vm1190, %v1043
      %1219 = vst.msk [vmem:[%s226 + $0xe0] sm:$0xff] %vm1190, %v1048
      %1220 = vst.msk [vmem:[%s226 + $0xe8] sm:$0xff] %vm1190, %v1051
      %1221 = vst.msk [vmem:[%s226 + $0xf0] sm:$0xff] %vm1190, %v1056
      %1222 = vst.msk [vmem:[%s226 + $0xf8] sm:$0xff] %vm1190, %v1059
      %1223 = vst.msk [vmem:[%s226 + $0x100] sm:$0xff] %vm1190, %v1064
      %1224 = vst.msk [vmem:[%s226 + $0x108] sm:$0xff] %vm1190, %v1067
      %1225 = vst.msk [vmem:[%s226 + $0x110] sm:$0xff] %vm1190, %v1072
      %1226 = vst.msk [vmem:[%s226 + $0x118] sm:$0xff] %vm1190, %v1075
      %1227 = vst.msk [vmem:[%s226 + $0x120] sm:$0xff] %vm1190, %v1080
      %1228 = vst.msk [vmem:[%s226 + $0x128] sm:$0xff] %vm1190, %v1083
      %1229 = vst.msk [vmem:[%s226 + $0x130] sm:$0xff] %vm1190, %v1088
      %1230 = vst.msk [vmem:[%s226 + $0x138] sm:$0xff] %vm1190, %v1091
      %1231 = vst.msk [vmem:[%s226 + $0x140] sm:$0xff] %vm1190, %v1096
      %1232 = vst.msk [vmem:[%s226 + $0x148] sm:$0xff] %vm1190, %v1099
      %1233 = vst.msk [vmem:[%s226 + $0x150] sm:$0xff] %vm1190, %v1104
      %1234 = vst.msk [vmem:[%s226 + $0x158] sm:$0xff] %vm1190, %v1107
      %1235 = vst.msk [vmem:[%s226 + $0x160] sm:$0xff] %vm1190, %v1112
      %1236 = vst.msk [vmem:[%s226 + $0x168] sm:$0xff] %vm1190, %v1115
      %1237 = vst.msk [vmem:[%s226 + $0x170] sm:$0xff] %vm1190, %v1120
      %1238 = vst.msk [vmem:[%s226 + $0x178] sm:$0xff] %vm1190, %v1123
      %1239 = vst.msk [vmem:[%s226 + $0x180] sm:$0xff] %vm1190, %v1128
      %1240 = vst.msk [vmem:[%s226 + $0x188] sm:$0xff] %vm1190, %v1131
      %1241 = vst.msk [vmem:[%s226 + $0x190] sm:$0xff] %vm1190, %v1136
      %1242 = vst.msk [vmem:[%s226 + $0x198] sm:$0xff] %vm1190, %v1139
      %1243 = vst.msk [vmem:[%s226 + $0x1a0] sm:$0xff] %vm1190, %v1144
      %1244 = vst.msk [vmem:[%s226 + $0x1a8] sm:$0xff] %vm1190, %v1147
      %1245 = vst.msk [vmem:[%s226 + $0x1b0] sm:$0xff] %vm1190, %v1152
      %1246 = vst.msk [vmem:[%s226 + $0x1b8] sm:$0xff] %vm1190, %v1155
      %1247 = vst.msk [vmem:[%s226 + $0x1c0] sm:$0xff] %vm1190, %v1160
      %1248 = vst.msk [vmem:[%s226 + $0x1c8] sm:$0xff] %vm1190, %v1163
      %1249 = vst.msk [vmem:[%s226 + $0x1d0] sm:$0xff] %vm1190, %v1168
      %1250 = vst.msk [vmem:[%s226 + $0x1d8] sm:$0xff] %vm1190, %v1171
      %1251 = vst.msk [vmem:[%s226 + $0x1e0] sm:$0xff] %vm1190, %v1176
      %1252 = vst.msk [vmem:[%s226 + $0x1e8] sm:$0xff] %vm1190, %v1179
      %1253 = vst.msk [vmem:[%s226 + $0x1f0] sm:$0xff] %vm1190, %v1184
      %1254 = vst.msk [vmem:[%s226 + $0x1f8] sm:$0xff] %vm1190, %v1187
      %s1255 = smul.u32 64, %s16
      %p1256 = scmp.lt.s32.totalorder %s1255, 127
      %s1257 = scalar_select %p1256, %s1255, 127
      %s1258 = smul.addr %s1257, 8
      %s1259 = scalar_lea.vmem %s5, %s1258
      // Predicated region
      $region41: #{sequential_forward.1} parent=39 // pred_check
        %p1260 = pneg %p144
      $region42: #{sequential_forward.1} parent=39 // pred_check_branch
        %1262 = sbr.rel (%p1260) target = $region44
      $region43: #{sequential_forward.1} parent=39 // pred_region
        %s1263 = smul.u32 64, %s16
      $region44: #{sequential_forward.1} parent=39 // pred_fallthru
        _
    $region40: #{sequential_forward.1} parent=5 // pred_fallthru
      _
    %p1264 = scmp.le.s32.totalorder 2, %s11
    // Predicated region
    $region45: #{sequential_forward.1} parent=5 // pred_check
      %p1265 = pneg %p1264
    $region46: #{sequential_forward.1} parent=5 // pred_check_branch
      %1267 = sbr.rel (%p1265) target = $region48
    $region47: #{sequential_forward.1} parent=5 // pred_region
      %s1268 = ssub.s32 %s11, 2
      // Predicated region
      $region49: #{sequential_forward.1} parent=47 // pred_check
        %p1269 = pneg %p150
      $region50: #{sequential_forward.1} parent=47 // pred_check_branch
        %1271 = sbr.rel (%p1269) target = $region52
      $region51: #{sequential_forward.1} parent=47 // pred_region
        %s1272 = smul.u32 64, %s17
        %p1273 = scmp.lt.s32.totalorder %s1272, 127
        %s1274 = scalar_select %p1273, %s1272, 127
        %s1275 = smul.addr %s1274, 8
        %s1276 = scalar_lea.vmem %s5, %s1275
      $region52: #{sequential_forward.1} parent=47 // pred_fallthru
        _
    $region48: #{sequential_forward.1} parent=5 // pred_fallthru
      _
  $region6: #{sequential_forward.1} parent=0 // loop_footer
    %s15 = sadd.s32 1, %s11
  $region7: #{sequential_forward.1} parent=0 // loop_footer_branch
    %10 = sbr.rel target = $region3
  $region8: #{sequential_forward.1} parent=0 // loop_exit
    _

</llo_original>
